<compile_context>
chip_gen: v7x
topology: tpu7x:2x2x1
jax: 0.10.0
libtpu: 0.0.40
codegen_flags: <defaults>
</compile_context>

<pallas_src>
import math
from functools import partial

import jax
import jax.numpy as jnp
from jax.experimental import pallas as pl
from jax.experimental.pallas import tpu as pltpu


# ------------------------------ constants ----------------------------------

D_PAD = 128       # lane-aligned contraction dim for layer 1 (zero-padded)
H1 = 256          # hidden 1 (matches W_m1: node_init_dim x 256)
H2 = 128          # hidden 2 (matches W_m11: 256 x 128)
C_PAD = 128       # lane-aligned padded class dim (real classes << 128)
MAX_TILE_B = 256  # rows per grid step when the batch is large


def _round_up(x, m):
    return ((x + m - 1) // m) * m


# ----------------------------- Pallas kernel --------------------------------

def _fused_mlp_ce_kernel(per_class, x_ref, lab_ref, w1_ref, w11_ref, w2_ref,
                         logits_ref, loss_ref):
    """relu(relu(x@W1)@W11)@W2 fused with per-row cross-entropy.

    x      : (TB, D_PAD) bf16   (feature rows, zero-padded cols)
    lab    : (TB, 1)     int32  (labels already shifted into [0, per_class))
    W1     : (D_PAD, H1) bf16   (zero-padded rows)
    W11    : (H1, H2)    bf16
    W2     : (H2, C_PAD) bf16   (zero-padded cols)
    logits : (TB, C_PAD) f32    (only [:, :per_class] is meaningful)
    loss   : (TB, 128)   f32    (per-row CE broadcast across lanes)
    """
    x = x_ref[...]
    h1 = jnp.maximum(
        jnp.dot(x, w1_ref[...], preferred_element_type=jnp.float32), 0.0)
    h2 = jnp.maximum(
        jnp.dot(h1.astype(jnp.bfloat16), w11_ref[...],
                preferred_element_type=jnp.float32), 0.0)
    # dropout(p=0.5) in eval mode == identity
    logits = jnp.dot(h2.astype(jnp.bfloat16), w2_ref[...],
                     preferred_element_type=jnp.float32)
    logits_ref[...] = logits

    # cross-entropy(reduction='none'): logsumexp(valid logits) - logits[label]
    col = jax.lax.broadcasted_iota(jnp.int32, logits.shape, 1)
    valid = col < per_class
    masked = jnp.where(valid, logits, jnp.float32(-1e30))
    m = jnp.max(masked, axis=-1, keepdims=True)
    lse = jnp.log(jnp.sum(jnp.exp(masked - m), axis=-1, keepdims=True)) + m
    picked = jnp.sum(jnp.where(col == lab_ref[...], logits, 0.0),
                     axis=-1, keepdims=True)
    loss_ref[...] = jnp.broadcast_to(lse - picked, loss_ref.shape)


# ------------------------------- wrapper -------------------------------------

def fused_mlp_ce(x, labels, w1p, w11p, w2p, per_class):
    """x: (B, D) float; labels: (B,) int32 in [0, per_class).
    Returns (logits (B, per_class) f32, loss (B,) f32)."""
    b, d = x.shape
    bp = _round_up(max(b, 8), 8)
    if bp > MAX_TILE_B:
        bp = _round_up(bp, MAX_TILE_B)
        tile_b = MAX_TILE_B
    else:
        tile_b = bp
    grid_b = bp // tile_b

    xp = jnp.zeros((bp, D_PAD), jnp.bfloat16).at[:b, :d].set(
        x.astype(jnp.bfloat16))
    labp = jnp.zeros((bp, 1), jnp.int32).at[:b, 0].set(
        labels.astype(jnp.int32))

    logits, loss = pl.pallas_call(
        partial(_fused_mlp_ce_kernel, per_class),
        out_shape=(
            jax.ShapeDtypeStruct((bp, C_PAD), jnp.float32),
            jax.ShapeDtypeStruct((bp, 128), jnp.float32),
        ),
        grid=(grid_b,),
        in_specs=[
            pl.BlockSpec((tile_b, D_PAD), lambda i: (i, 0)),
            pl.BlockSpec((tile_b, 1), lambda i: (i, 0)),
            pl.BlockSpec((D_PAD, H1), lambda i: (0, 0)),   # weights stay resident
            pl.BlockSpec((H1, H2), lambda i: (0, 0)),
            pl.BlockSpec((H2, C_PAD), lambda i: (0, 0)),
        ],
        out_specs=(
            pl.BlockSpec((tile_b, C_PAD), lambda i: (i, 0)),
            pl.BlockSpec((tile_b, 128), lambda i: (i, 0)),
        ),
        compiler_params=pltpu.CompilerParams(
            dimension_semantics=("parallel",)),
    )(xp, labp, w1p, w11p, w2p)
    return logits[:b, :per_class], loss[:b, 0]


# --------------------------- PGen (mlp) forward ------------------------------

def xavier_normal(key, shape):
    fan_in, fan_out = shape
    std = math.sqrt(2.0 / (fan_in + fan_out))
    return jax.random.normal(key, shape, dtype=jnp.float32) * std


def init_pgen_mlp_params(key, node_init_dim, per_class):
    k1, k2, k3 = jax.random.split(key, 3)
    return {
        "W_m1": xavier_normal(k1, (node_init_dim, 256)),
        "W_m11": xavier_normal(k2, (256, 128)),
        "W_m2": xavier_normal(k3, (128, per_class)),
    }


@partial(jax.jit, static_argnames=("task", "per_class"))
def _pgen_dense_path(params, node_feature, src_idxs, dst_idxs,
                     src_label, dst_label, task, per_class):
    """Static-shape jitted path: gather, fused MLP+CE on the full src+dst batch."""
    lo = task * per_class
    idxs = jnp.concatenate([src_idxs, dst_idxs], axis=0)
    labels = jnp.concatenate([src_label, dst_label], axis=0)
    x = node_feature[idxs]                                  # tiny XLA gather
    labels = jnp.clip(labels - lo, 0, per_class - 1)        # out-of-task rows dropped later

    d = params["W_m1"].shape[0]
    w1p = jnp.zeros((D_PAD, H1), jnp.bfloat16).at[:d, :].set(
        params["W_m1"].astype(jnp.bfloat16))
    w11p = params["W_m11"].astype(jnp.bfloat16)
    w2p = jnp.zeros((H2, C_PAD), jnp.bfloat16).at[:, :per_class].set(
        params["W_m2"].astype(jnp.bfloat16))

    return fused_mlp_ce(x, labels, w1p, w11p, w2p, per_class)


def pgen_forward_mlp_part(params, node_feature, src_idxs, dst_idxs,
                          src_label, dst_label, task, per_class):
    """Reproduces PGen.forward for pmethod='mlp', ch='part' (eval mode)."""
    lo = task * per_class
    hi = (task + 1) * per_class

    logits, loss = _pgen_dense_path(params, node_feature, src_idxs, dst_idxs,
                                    src_label, dst_label,
                                    task=task, per_class=per_class)

    # 'part' task-mask row selection (data-dependent shapes kept out of jit).
    nsrc = src_idxs.shape[0]
    src_task_mask = (src_label >= lo) & (src_label < hi)
    dst_task_mask = (dst_label >= lo) & (dst_label < hi)

    src_logits2 = logits[:nsrc][src_task_mask]
    dst_logits2 = logits[nsrc:][dst_task_mask]
    loss_s2 = loss[:nsrc][src_task_mask]
    loss_d2 = loss[nsrc:][dst_task_mask]
    return src_logits2, dst_logits2, loss_s2, loss_d2


# ---------------------------------- main -------------------------------------

if __name__ == "__main__":
    key = jax.random.PRNGKey(0)
    k_feat, k_lab, k_src, k_dst, k_params = jax.random.split(key, 5)

    num_nodes = 64
    node_init_dim = 32
    per_class = 4
    n_task = 2
    task = 0
    batch = 16

    node_feature = jax.random.normal(k_feat, (num_nodes, node_init_dim),
                                     dtype=jnp.float32)
    node_label = jax.random.randint(k_lab, (num_nodes,), 0,
                                    per_class * n_task, dtype=jnp.int32)
    src_idxs = jax.random.randint(k_src, (batch,), 0, num_nodes,
                                  dtype=jnp.int32)
    dst_idxs = jax.random.randint(k_dst, (batch,), 0, num_nodes,
                                  dtype=jnp.int32)
    src_label = node_label[src_idxs]
    dst_label = node_label[dst_idxs]

    params = init_pgen_mlp_params(k_params, node_init_dim, per_class)

    out = pgen_forward_mlp_part(params, node_feature, src_idxs, dst_idxs,
                                src_label, dst_label, task, per_class)
    jax.block_until_ready(out)

    src_logits2, dst_logits2, loss_s2, loss_d2 = out
    assert src_logits2.shape[1] == per_class
    assert dst_logits2.shape[1] == per_class
    assert loss_s2.shape[0] == src_logits2.shape[0]
    assert loss_d2.shape[0] == dst_logits2.shape[0]
    assert bool(jnp.all(jnp.isfinite(loss_s2))) and bool(jnp.all(jnp.isfinite(loss_d2)))
    print("KERNEL_OK")
</pallas_src>

<mosaic_0001>
module attributes {stable_mosaic.version = 11 : i64} {
  func.func @_fused_mlp_ce_kernel(%arg0: i32, %arg1: memref<32x128xbf16, #tpu.memory_space<vmem>>, %arg2: memref<32x1xi32, #tpu.memory_space<vmem>>, %arg3: memref<128x256xbf16, #tpu.memory_space<vmem>>, %arg4: memref<256x128xbf16, #tpu.memory_space<vmem>>, %arg5: memref<128x128xbf16, #tpu.memory_space<vmem>>, %arg6: memref<32x128xf32, #tpu.memory_space<vmem>>, %arg7: memref<32x128xf32, #tpu.memory_space<vmem>>) attributes {dimension_semantics = [#tpu.dimension_semantics<parallel>], iteration_bounds = array<i64: 1>, scalar_prefetch = 0 : i64, scratch_operands = 0 : i64, tpu.core_type = #tpu.core_type<tc>, window_params = [{transform_indices = @transform_0, window_bounds = array<i64: 32, 128>}, {transform_indices = @transform_1, window_bounds = array<i64: 32, 1>}, {pipeline_mode = #tpu.pipeline_mode<synchronous>, transform_indices = @transform_2, window_bounds = array<i64: 128, 256>}, {pipeline_mode = #tpu.pipeline_mode<synchronous>, transform_indices = @transform_3, window_bounds = array<i64: 256, 128>}, {pipeline_mode = #tpu.pipeline_mode<synchronous>, transform_indices = @transform_4, window_bounds = array<i64: 128, 128>}, {transform_indices = @transform_5, window_bounds = array<i64: 32, 128>}, {transform_indices = @transform_6, window_bounds = array<i64: 32, 128>}]} {
    %c0 = arith.constant 0 : index
    %c0_0 = arith.constant 0 : index
    %0 = vector.load %arg1[%c0, %c0_0] : memref<32x128xbf16, #tpu.memory_space<vmem>>, vector<32x128xbf16>
    %c0_1 = arith.constant 0 : index
    %c0_2 = arith.constant 0 : index
    %1 = vector.load %arg3[%c0_1, %c0_2] : memref<128x256xbf16, #tpu.memory_space<vmem>>, vector<128x256xbf16>
    %cst = arith.constant dense<0.000000e+00> : vector<32x256xf32>
    %2 = tpu.matmul %0, %1, %cst {dimension_numbers = #tpu.dot_dimension_numbers<[1], [0], [0], [1], [0, 0, 1, 1], [], []>} : vector<32x128xbf16>, vector<128x256xbf16>, vector<32x256xf32> -> vector<32x256xf32>
    %cst_3 = arith.constant 0.000000e+00 : f32
    %3 = vector.broadcast %cst_3 : f32 to vector<32x256xf32>
    %4 = arith.maximumf %2, %3 : vector<32x256xf32>
    %5 = arith.truncf %4 : vector<32x256xf32> to vector<32x256xbf16>
    %c0_4 = arith.constant 0 : index
    %c0_5 = arith.constant 0 : index
    %6 = vector.load %arg4[%c0_4, %c0_5] : memref<256x128xbf16, #tpu.memory_space<vmem>>, vector<256x128xbf16>
    %cst_6 = arith.constant dense<0.000000e+00> : vector<32x128xf32>
    %7 = tpu.matmul %5, %6, %cst_6 {dimension_numbers = #tpu.dot_dimension_numbers<[1], [0], [0], [1], [0, 0, 1, 1], [], []>} : vector<32x256xbf16>, vector<256x128xbf16>, vector<32x128xf32> -> vector<32x128xf32>
    %cst_7 = arith.constant 0.000000e+00 : f32
    %8 = vector.broadcast %cst_7 : f32 to vector<32x128xf32>
    %9 = arith.maximumf %7, %8 : vector<32x128xf32>
    %10 = arith.truncf %9 : vector<32x128xf32> to vector<32x128xbf16>
    %c0_8 = arith.constant 0 : index
    %c0_9 = arith.constant 0 : index
    %11 = vector.load %arg5[%c0_8, %c0_9] : memref<128x128xbf16, #tpu.memory_space<vmem>>, vector<128x128xbf16>
    %cst_10 = arith.constant dense<0.000000e+00> : vector<32x128xf32>
    %12 = tpu.matmul %10, %11, %cst_10 {dimension_numbers = #tpu.dot_dimension_numbers<[1], [0], [0], [1], [0, 0, 1, 1], [], []>} : vector<32x128xbf16>, vector<128x128xbf16>, vector<32x128xf32> -> vector<32x128xf32>
    %c0_11 = arith.constant 0 : index
    %c0_12 = arith.constant 0 : index
    %13 = vector.load %arg6[%c0_11, %c0_12] : memref<32x128xf32, #tpu.memory_space<vmem>>, vector<32x128xf32>
    tpu.vector_store %arg6[%c0_11, %c0_12], %12 {strides = array<i32>} : memref<32x128xf32, #tpu.memory_space<vmem>>, vector<32x128xf32>,
    %14 = tpu.iota {dimensions = array<i32: 1>} : vector<32x128xi32>
    %c4_i32 = arith.constant 4 : i32
    %15 = vector.broadcast %c4_i32 : i32 to vector<32x128xi32>
    %16 = arith.cmpi slt, %14, %15 : vector<32x128xi32>
    %cst_13 = arith.constant -1.000000e+30 : f32
    %17 = vector.broadcast %cst_13 : f32 to vector<32x128xf32>
    %18 = arith.select %16, %12, %17 : vector<32x128xi1>, vector<32x128xf32>
    %cst_14 = arith.constant dense<0xFF800000> : vector<32xf32>
    %19 = vector.multi_reduction <maximumf>, %18, %cst_14 [1] : vector<32x128xf32> to vector<32xf32>
    %20 = vector.shape_cast %19 : vector<32xf32> to vector<32x1xf32>
    %21 = vector.broadcast %20 : vector<32x1xf32> to vector<32x128xf32>
    %22 = arith.subf %18, %21 : vector<32x128xf32>
    %23 = math.exp %22 : vector<32x128xf32>
    %cst_15 = arith.constant dense<0.000000e+00> : vector<32xf32>
    %24 = vector.multi_reduction <add>, %23, %cst_15 [1] : vector<32x128xf32> to vector<32xf32>
    %25 = vector.shape_cast %24 : vector<32xf32> to vector<32x1xf32>
    %26 = math.log %25 : vector<32x1xf32>
    %27 = arith.addf %26, %20 : vector<32x1xf32>
    %c0_16 = arith.constant 0 : index
    %c0_17 = arith.constant 0 : index
    %28 = vector.load %arg2[%c0_16, %c0_17] : memref<32x1xi32, #tpu.memory_space<vmem>>, vector<32x1xi32>
    %29 = vector.broadcast %28 : vector<32x1xi32> to vector<32x128xi32>
    %30 = arith.cmpi eq, %14, %29 : vector<32x128xi32>
    %cst_18 = arith.constant 0.000000e+00 : f32
    %31 = vector.broadcast %cst_18 : f32 to vector<32x128xf32>
    %32 = arith.select %30, %12, %31 : vector<32x128xi1>, vector<32x128xf32>
    %cst_19 = arith.constant dense<0.000000e+00> : vector<32xf32>
    %33 = vector.multi_reduction <add>, %32, %cst_19 [1] : vector<32x128xf32> to vector<32xf32>
    %34 = vector.shape_cast %33 : vector<32xf32> to vector<32x1xf32>
    %35 = arith.subf %27, %34 : vector<32x1xf32>
    %36 = vector.shape_cast %35 : vector<32x1xf32> to vector<32x1xf32>
    %37 = vector.broadcast %36 : vector<32x1xf32> to vector<32x128xf32>
    %c0_20 = arith.constant 0 : index
    %c0_21 = arith.constant 0 : index
    %38 = vector.load %arg7[%c0_20, %c0_21] : memref<32x128xf32, #tpu.memory_space<vmem>>, vector<32x128xf32>
    tpu.vector_store %arg7[%c0_20, %c0_21], %37 {strides = array<i32>} : memref<32x128xf32, #tpu.memory_space<vmem>>, vector<32x128xf32>,
    return
  }
  func.func @transform_0(%arg0: i32) -> (i32, i32) {
    %c0_i32 = arith.constant 0 : i32
    %c0_i32_0 = arith.constant 0 : i32
    return %arg0, %c0_i32 : i32, i32
  }
  func.func @transform_1(%arg0: i32) -> (i32, i32) {
    %c0_i32 = arith.constant 0 : i32
    %c0_i32_0 = arith.constant 0 : i32
    return %arg0, %c0_i32 : i32, i32
  }
  func.func @transform_2(%arg0: i32) -> (i32, i32) {
    %c0_i32 = arith.constant 0 : i32
    %c0_i32_0 = arith.constant 0 : i32
    %c0_i32_1 = arith.constant 0 : i32
    return %c0_i32, %c0_i32_0 : i32, i32
  }
  func.func @transform_3(%arg0: i32) -> (i32, i32) {
    %c0_i32 = arith.constant 0 : i32
    %c0_i32_0 = arith.constant 0 : i32
    %c0_i32_1 = arith.constant 0 : i32
    return %c0_i32, %c0_i32_0 : i32, i32
  }
  func.func @transform_4(%arg0: i32) -> (i32, i32) {
    %c0_i32 = arith.constant 0 : i32
    %c0_i32_0 = arith.constant 0 : i32
    %c0_i32_1 = arith.constant 0 : i32
    return %c0_i32, %c0_i32_0 : i32, i32
  }
  func.func @transform_5(%arg0: i32) -> (i32, i32) {
    %c0_i32 = arith.constant 0 : i32
    %c0_i32_0 = arith.constant 0 : i32
    return %arg0, %c0_i32 : i32, i32
  }
  func.func @transform_6(%arg0: i32) -> (i32, i32) {
    %c0_i32 = arith.constant 0 : i32
    %c0_i32_0 = arith.constant 0 : i32
    return %arg0, %c0_i32 : i32, i32
  }
}

</mosaic_0001>

<llo_original>
// kernel: _pgen_dense_path.1
$region0: #{_pgen_dense_path.1}
  #allocation0 [shape = 'u32[]', space=smem, size = 0x4, offset = 0x4, fixed_abs, tag = 'smem constant byte address 0x4 - core index']
  #allocation1 [shape = 'u32[144,128]{1,0:T(1,128)}', space=vmem, size = 0x12000, scoped, tag = 'internal scratch']
  %s0 = inlined_call_operand.vmem [shape: bf16[32,128], index: 0, kind: input, shape index: {}]
  %s1 = inlined_call_operand.vmem [shape: s32[32,1], index: 1, kind: input, shape index: {}]
  %s2 = inlined_call_operand.vmem [shape: bf16[128,256], index: 2, kind: input, shape index: {}]
  %s3 = inlined_call_operand.vmem [shape: bf16[256,128], index: 3, kind: input, shape index: {}]
  %s4 = inlined_call_operand.vmem [shape: bf16[128,128], index: 4, kind: input, shape index: {}]
  %s5 = inlined_call_operand.vmem [shape: f32[32,128], index: 5, kind: output, shape index: {0}]
  %s6 = inlined_call_operand.vmem [shape: f32[32,128], index: 6, kind: output, shape index: {1}]
  %7 = xla_tuple %s5, %s6
  %s8 = sld [smem:[#allocation0]]
  $region38: #{_pgen_dense_path.1} parent=0
    _
  %s10 = ssub.s32 1, %s8
  %s11 = scalar_select 0, %s10, %s8
  // Predicated region
  $region2: #{_pgen_dense_path.1} parent=0 // pred_check
    _
  $region3: #{_pgen_dense_path.1} parent=0 // pred_check_branch
    %13 = sbr.rel (0) target = $region5
  $region4: #{_pgen_dense_path.1} parent=0 // pred_region
    _
  $region5: #{_pgen_dense_path.1} parent=0 // pred_fallthru
    _
  // Predicated region
  $region6: #{_pgen_dense_path.1} parent=0 // pred_check
    _
  $region7: #{_pgen_dense_path.1} parent=0 // pred_check_branch
    %15 = sbr.rel (0) target = $region9
  $region8: #{_pgen_dense_path.1} parent=0 // pred_region
    _
  $region9: #{_pgen_dense_path.1} parent=0 // pred_fallthru
    _
  // Predicated region
  $region10: #{_pgen_dense_path.1} parent=0 // pred_check
    _
  $region11: #{_pgen_dense_path.1} parent=0 // pred_check_branch
    %17 = sbr.rel (0) target = $region13
  $region12: #{_pgen_dense_path.1} parent=0 // pred_region
    _
  $region13: #{_pgen_dense_path.1} parent=0 // pred_fallthru
    _
  // Predicated region
  $region14: #{_pgen_dense_path.1} parent=0 // pred_check
    _
  $region15: #{_pgen_dense_path.1} parent=0 // pred_check_branch
    %19 = sbr.rel (0) target = $region17
  $region16: #{_pgen_dense_path.1} parent=0 // pred_region
    _
  $region17: #{_pgen_dense_path.1} parent=0 // pred_fallthru
    _
  // Predicated region
  $region18: #{_pgen_dense_path.1} parent=0 // pred_check
    _
  $region19: #{_pgen_dense_path.1} parent=0 // pred_check_branch
    %21 = sbr.rel (0) target = $region21
  $region20: #{_pgen_dense_path.1} parent=0 // pred_region
    _
  $region21: #{_pgen_dense_path.1} parent=0 // pred_fallthru
    _
  %v23 = vld [vmem:[%s0] sm:$0xf]
  %v24 = vld [vmem:[%s0 + $0x4] sm:$0xf]
  %v25 = vld [vmem:[%s0 + $0x8] sm:$0xf]
  %v26 = vld [vmem:[%s0 + $0xc] sm:$0xf]
  %v27 = vld [vmem:[%s2] sm:$0xff]
  %v28 = vld [vmem:[%s2 + $0x8] sm:$0xff]
  %v29 = vld [vmem:[%s2 + $0x10] sm:$0xff]
  %v30 = vld [vmem:[%s2 + $0x18] sm:$0xff]
  %v31 = vld [vmem:[%s2 + $0x20] sm:$0xff]
  %v32 = vld [vmem:[%s2 + $0x28] sm:$0xff]
  %v33 = vld [vmem:[%s2 + $0x30] sm:$0xff]
  %v34 = vld [vmem:[%s2 + $0x38] sm:$0xff]
  %v35 = vld [vmem:[%s2 + $0x40] sm:$0xff]
  %v36 = vld [vmem:[%s2 + $0x48] sm:$0xff]
  %v37 = vld [vmem:[%s2 + $0x50] sm:$0xff]
  %v38 = vld [vmem:[%s2 + $0x58] sm:$0xff]
  %v39 = vld [vmem:[%s2 + $0x60] sm:$0xff]
  %v40 = vld [vmem:[%s2 + $0x68] sm:$0xff]
  %v41 = vld [vmem:[%s2 + $0x70] sm:$0xff]
  %v42 = vld [vmem:[%s2 + $0x78] sm:$0xff]
  %v47 = vunpack.c.l.b16 %v23
  %v48 = vunpack.c.l.b16 %v24
  %v49 = vunpack.c.l.b16 %v25
  %v50 = vunpack.c.l.b16 %v26
  %v51 = vpack.c.b16 %v48, %v47
  %v52 = vpack.c.b16 %v50, %v49
  %v71 = vunpack.c.l.b16 %v27
  %v72 = vunpack.c.h.b16 %v27
  %v73 = vunpack.c.l.b16 %v28
  %v74 = vunpack.c.h.b16 %v28
  %v75 = vunpack.c.l.b16 %v29
  %v76 = vunpack.c.h.b16 %v29
  %v77 = vunpack.c.l.b16 %v30
  %v78 = vunpack.c.h.b16 %v30
  %v79 = vunpack.c.l.b16 %v31
  %v80 = vunpack.c.h.b16 %v31
  %v81 = vunpack.c.l.b16 %v32
  %v82 = vunpack.c.h.b16 %v32
  %v83 = vunpack.c.l.b16 %v33
  %v84 = vunpack.c.h.b16 %v33
  %v85 = vunpack.c.l.b16 %v34
  %v86 = vunpack.c.h.b16 %v34
  %v87 = vunpack.c.l.b16 %v35
  %v88 = vunpack.c.h.b16 %v35
  %v89 = vunpack.c.l.b16 %v36
  %v90 = vunpack.c.h.b16 %v36
  %v91 = vunpack.c.l.b16 %v37
  %v92 = vunpack.c.h.b16 %v37
  %v93 = vunpack.c.l.b16 %v38
  %v94 = vunpack.c.h.b16 %v38
  %v95 = vunpack.c.l.b16 %v39
  %v96 = vunpack.c.h.b16 %v39
  %v97 = vunpack.c.l.b16 %v40
  %v98 = vunpack.c.h.b16 %v40
  %v99 = vunpack.c.l.b16 %v41
  %v100 = vunpack.c.h.b16 %v41
  %v101 = vunpack.c.l.b16 %v42
  %v102 = vunpack.c.h.b16 %v42
  %v103 = vpack.c.b16 %v73, %v71
  %v104 = vpack.c.b16 %v74, %v72
  %v105 = vpack.c.b16 %v77, %v75
  %v106 = vpack.c.b16 %v78, %v76
  %v107 = vpack.c.b16 %v81, %v79
  %v108 = vpack.c.b16 %v82, %v80
  %v109 = vpack.c.b16 %v85, %v83
  %v110 = vpack.c.b16 %v86, %v84
  %v111 = vpack.c.b16 %v89, %v87
  %v112 = vpack.c.b16 %v90, %v88
  %v113 = vpack.c.b16 %v93, %v91
  %v114 = vpack.c.b16 %v94, %v92
  %v115 = vpack.c.b16 %v97, %v95
  %v116 = vpack.c.b16 %v98, %v96
  %v117 = vpack.c.b16 %v101, %v99
  %v118 = vpack.c.b16 %v102, %v100
  %135 = vmatprep.subr.bf16.mxu0 %v104
  %136 = vmatpush1.bf16.msra.mxu0 %v103
  %137 = vmatprep.subr.bf16.mxu0 %v106
  %138 = vmatpush1.bf16.msra.mxu0 %v105
  %139 = vmatprep.subr.bf16.mxu0 %v108
  %140 = vmatpush1.bf16.msra.mxu0 %v107
  %141 = vmatprep.subr.bf16.mxu0 %v110
  %142 = vmatpush1.bf16.msra.mxu0 %v109
  %143 = vmatprep.subr.bf16.mxu0 %v112
  %144 = vmatpush1.bf16.msra.mxu0 %v111
  %145 = vmatprep.subr.bf16.mxu0 %v114
  %146 = vmatpush1.bf16.msra.mxu0 %v113
  %147 = vmatprep.subr.bf16.mxu0 %v116
  %148 = vmatpush1.bf16.msra.mxu0 %v115
  %149 = vmatprep.subr.bf16.mxu0 %v118
  %150 = vmatpush1.bf16.msra.mxu0 %v117
  %151 = vmatprep.subr.bf16.mxu0 0
  %152 = vmatpush1.bf16.msra.mxu0 0
  %153 = vmatprep.subr.bf16.mxu0 0
  %154 = vmatpush1.bf16.msra.mxu0 0
  %155 = vmatprep.subr.bf16.mxu0 0
  %156 = vmatpush1.bf16.msra.mxu0 0
  %157 = vmatprep.subr.bf16.mxu0 0
  %158 = vmatpush1.bf16.msra.mxu0 0
  %159 = vmatprep.subr.bf16.mxu0 0
  %160 = vmatpush1.bf16.msra.mxu0 0
  %161 = vmatprep.subr.bf16.mxu0 0
  %162 = vmatpush1.bf16.msra.mxu0 0
  %163 = vmatprep.subr.bf16.mxu0 0
  %164 = vmatpush1.bf16.msra.mxu0 0
  %165 = vmatprep.subr.bf16.mxu0 0
  %166 = vmatpush1.bf16.msra.mxu0 0
  %167 = vmatprep.mubr.bf16.mxu0 0
  %168 = vmatmul.mubr.bf16.gmra.mrb[0].mxu0 %v51
  %v169 = vpop.f32.mrb[0].mxu0
  %v170 = vadd.f32 0.0, %v169
  %v171 = vpop.f32.mrb[0].mxu0
  %v172 = vadd.f32 0.0, %v171
  %v173 = vpop.f32.mrb[0].mxu0
  %v174 = vadd.f32 0.0, %v173
  %v175 = vpop.f32.mrb[0].mxu0
  %v176 = vadd.f32 0.0, %v175
  %177 = vmatprep.mubr.bf16.mxu0 0
  %178 = vmatmul.mubr.bf16.gmra.mrb[0].mxu0 %v52
  %v179 = vpop.f32.mrb[0].mxu0
  %v180 = vadd.f32 0.0, %v179
  %v181 = vpop.f32.mrb[0].mxu0
  %v182 = vadd.f32 0.0, %v181
  %v183 = vpop.f32.mrb[0].mxu0
  %v184 = vadd.f32 0.0, %v183
  %v185 = vpop.f32.mrb[0].mxu0
  %v186 = vadd.f32 0.0, %v185
  %187 = vdwg.mxu0
  %v188 = vmax.f32 %v170, 0.0
  %v189 = vmax.f32 %v172, 0.0
  %v190 = vmax.f32 %v174, 0.0
  %v191 = vmax.f32 %v176, 0.0
  %v192 = vmax.f32 %v180, 0.0
  %v193 = vmax.f32 %v182, 0.0
  %v194 = vmax.f32 %v184, 0.0
  %v195 = vmax.f32 %v186, 0.0
  %v196 = vpack.c.bf16 %v190, %v188
  %v197 = vpack.c.bf16 %v191, %v189
  %v198 = vpack.c.bf16 %v194, %v192
  %v199 = vpack.c.bf16 %v195, %v193
  %v200 = vld [vmem:[%s3] sm:$0xf]
  %v201 = vld [vmem:[%s3 + $0x4] sm:$0xf]
  %v202 = vld [vmem:[%s3 + $0x8] sm:$0xf]
  %v203 = vld [vmem:[%s3 + $0xc] sm:$0xf]
  %v204 = vld [vmem:[%s3 + $0x10] sm:$0xf]
  %v205 = vld [vmem:[%s3 + $0x14] sm:$0xf]
  %v206 = vld [vmem:[%s3 + $0x18] sm:$0xf]
  %v207 = vld [vmem:[%s3 + $0x1c] sm:$0xf]
  %v208 = vld [vmem:[%s3 + $0x20] sm:$0xf]
  %v209 = vld [vmem:[%s3 + $0x24] sm:$0xf]
  %v210 = vld [vmem:[%s3 + $0x28] sm:$0xf]
  %v211 = vld [vmem:[%s3 + $0x2c] sm:$0xf]
  %v212 = vld [vmem:[%s3 + $0x30] sm:$0xf]
  %v213 = vld [vmem:[%s3 + $0x34] sm:$0xf]
  %v214 = vld [vmem:[%s3 + $0x38] sm:$0xf]
  %v215 = vld [vmem:[%s3 + $0x3c] sm:$0xf]
  %v216 = vld [vmem:[%s3 + $0x40] sm:$0xf]
  %v217 = vld [vmem:[%s3 + $0x44] sm:$0xf]
  %v218 = vld [vmem:[%s3 + $0x48] sm:$0xf]
  %v219 = vld [vmem:[%s3 + $0x4c] sm:$0xf]
  %v220 = vld [vmem:[%s3 + $0x50] sm:$0xf]
  %v221 = vld [vmem:[%s3 + $0x54] sm:$0xf]
  %v222 = vld [vmem:[%s3 + $0x58] sm:$0xf]
  %v223 = vld [vmem:[%s3 + $0x5c] sm:$0xf]
  %v224 = vld [vmem:[%s3 + $0x60] sm:$0xf]
  %v225 = vld [vmem:[%s3 + $0x64] sm:$0xf]
  %v226 = vld [vmem:[%s3 + $0x68] sm:$0xf]
  %v227 = vld [vmem:[%s3 + $0x6c] sm:$0xf]
  %v228 = vld [vmem:[%s3 + $0x70] sm:$0xf]
  %v229 = vld [vmem:[%s3 + $0x74] sm:$0xf]
  %v230 = vld [vmem:[%s3 + $0x78] sm:$0xf]
  %v231 = vld [vmem:[%s3 + $0x7c] sm:$0xf]
  %v264 = vunpack.c.l.b16 %v200
  %v265 = vunpack.c.l.b16 %v201
  %v266 = vunpack.c.l.b16 %v202
  %v267 = vunpack.c.l.b16 %v203
  %v268 = vunpack.c.l.b16 %v204
  %v269 = vunpack.c.l.b16 %v205
  %v270 = vunpack.c.l.b16 %v206
  %v271 = vunpack.c.l.b16 %v207
  %v272 = vunpack.c.l.b16 %v208
  %v273 = vunpack.c.l.b16 %v209
  %v274 = vunpack.c.l.b16 %v210
  %v275 = vunpack.c.l.b16 %v211
  %v276 = vunpack.c.l.b16 %v212
  %v277 = vunpack.c.l.b16 %v213
  %v278 = vunpack.c.l.b16 %v214
  %v279 = vunpack.c.l.b16 %v215
  %v280 = vunpack.c.l.b16 %v216
  %v281 = vunpack.c.l.b16 %v217
  %v282 = vunpack.c.l.b16 %v218
  %v283 = vunpack.c.l.b16 %v219
  %v284 = vunpack.c.l.b16 %v220
  %v285 = vunpack.c.l.b16 %v221
  %v286 = vunpack.c.l.b16 %v222
  %v287 = vunpack.c.l.b16 %v223
  %v288 = vunpack.c.l.b16 %v224
  %v289 = vunpack.c.l.b16 %v225
  %v290 = vunpack.c.l.b16 %v226
  %v291 = vunpack.c.l.b16 %v227
  %v292 = vunpack.c.l.b16 %v228
  %v293 = vunpack.c.l.b16 %v229
  %v294 = vunpack.c.l.b16 %v230
  %v295 = vunpack.c.l.b16 %v231
  %v296 = vpack.c.b16 %v265, %v264
  %v297 = vpack.c.b16 %v267, %v266
  %v298 = vpack.c.b16 %v269, %v268
  %v299 = vpack.c.b16 %v271, %v270
  %v300 = vpack.c.b16 %v273, %v272
  %v301 = vpack.c.b16 %v275, %v274
  %v302 = vpack.c.b16 %v277, %v276
  %v303 = vpack.c.b16 %v279, %v278
  %v304 = vpack.c.b16 %v281, %v280
  %v305 = vpack.c.b16 %v283, %v282
  %v306 = vpack.c.b16 %v285, %v284
  %v307 = vpack.c.b16 %v287, %v286
  %v308 = vpack.c.b16 %v289, %v288
  %v309 = vpack.c.b16 %v291, %v290
  %v310 = vpack.c.b16 %v293, %v292
  %v311 = vpack.c.b16 %v295, %v294
  %328 = vmatprep.subr.bf16.mxu0 0
  %329 = vmatpush1.bf16.msra.mxu0 %v296
  %330 = vmatprep.subr.bf16.mxu0 0
  %331 = vmatpush1.bf16.msra.mxu0 %v297
  %332 = vmatprep.subr.bf16.mxu0 0
  %333 = vmatpush1.bf16.msra.mxu0 %v298
  %334 = vmatprep.subr.bf16.mxu0 0
  %335 = vmatpush1.bf16.msra.mxu0 %v299
  %336 = vmatprep.subr.bf16.mxu0 0
  %337 = vmatpush1.bf16.msra.mxu0 %v300
  %338 = vmatprep.subr.bf16.mxu0 0
  %339 = vmatpush1.bf16.msra.mxu0 %v301
  %340 = vmatprep.subr.bf16.mxu0 0
  %341 = vmatpush1.bf16.msra.mxu0 %v302
  %342 = vmatprep.subr.bf16.mxu0 0
  %343 = vmatpush1.bf16.msra.mxu0 %v303
  %344 = vmatprep.subr.bf16.mxu0 0
  %345 = vmatpush1.bf16.msra.mxu0 %v304
  %346 = vmatprep.subr.bf16.mxu0 0
  %347 = vmatpush1.bf16.msra.mxu0 %v305
  %348 = vmatprep.subr.bf16.mxu0 0
  %349 = vmatpush1.bf16.msra.mxu0 %v306
  %350 = vmatprep.subr.bf16.mxu0 0
  %351 = vmatpush1.bf16.msra.mxu0 %v307
  %352 = vmatprep.subr.bf16.mxu0 0
  %353 = vmatpush1.bf16.msra.mxu0 %v308
  %354 = vmatprep.subr.bf16.mxu0 0
  %355 = vmatpush1.bf16.msra.mxu0 %v309
  %356 = vmatprep.subr.bf16.mxu0 0
  %357 = vmatpush1.bf16.msra.mxu0 %v310
  %358 = vmatprep.subr.bf16.mxu0 0
  %359 = vmatpush1.bf16.msra.mxu0 %v311
  %360 = vmatprep.mubr.bf16.mxu0 %v197
  %361 = vmatmul.mubr.bf16.gmra.mrb[0].mxu0 %v196
  %v362 = vpop.f32.mrb[0].mxu0
  %v363 = vadd.f32 0.0, %v362
  %v364 = vpop.f32.mrb[0].mxu0
  %v365 = vpop.f32.mrb[0].mxu0
  %v366 = vadd.f32 0.0, %v365
  %v367 = vpop.f32.mrb[0].mxu0
  %368 = vmatprep.mubr.bf16.mxu0 %v199
  %369 = vmatmul.mubr.bf16.gmra.mrb[0].mxu0 %v198
  %v370 = vpop.f32.mrb[0].mxu0
  %v371 = vadd.f32 0.0, %v370
  %v372 = vpop.f32.mrb[0].mxu0
  %v373 = vpop.f32.mrb[0].mxu0
  %v374 = vadd.f32 0.0, %v373
  %v375 = vpop.f32.mrb[0].mxu0
  %376 = vdwg.mxu0
  %v377 = vmax.f32 %v363, 0.0
  %v378 = vmax.f32 %v366, 0.0
  %v379 = vmax.f32 %v371, 0.0
  %v380 = vmax.f32 %v374, 0.0
  %v381 = vpack.c.bf16 %v378, %v377
  %v382 = vpack.c.bf16 %v380, %v379
  %v383 = vld [vmem:[%s4] sm:$0xf]
  %v384 = vld [vmem:[%s4 + $0x4] sm:$0xf]
  %v385 = vld [vmem:[%s4 + $0x8] sm:$0xf]
  %v386 = vld [vmem:[%s4 + $0xc] sm:$0xf]
  %v387 = vld [vmem:[%s4 + $0x10] sm:$0xf]
  %v388 = vld [vmem:[%s4 + $0x14] sm:$0xf]
  %v389 = vld [vmem:[%s4 + $0x18] sm:$0xf]
  %v390 = vld [vmem:[%s4 + $0x1c] sm:$0xf]
  %v391 = vld [vmem:[%s4 + $0x20] sm:$0xf]
  %v392 = vld [vmem:[%s4 + $0x24] sm:$0xf]
  %v393 = vld [vmem:[%s4 + $0x28] sm:$0xf]
  %v394 = vld [vmem:[%s4 + $0x2c] sm:$0xf]
  %v395 = vld [vmem:[%s4 + $0x30] sm:$0xf]
  %v396 = vld [vmem:[%s4 + $0x34] sm:$0xf]
  %v397 = vld [vmem:[%s4 + $0x38] sm:$0xf]
  %v398 = vld [vmem:[%s4 + $0x3c] sm:$0xf]
  %v415 = vunpack.c.l.b16 %v383
  %v416 = vunpack.c.l.b16 %v384
  %v417 = vunpack.c.l.b16 %v385
  %v418 = vunpack.c.l.b16 %v386
  %v419 = vunpack.c.l.b16 %v387
  %v420 = vunpack.c.l.b16 %v388
  %v421 = vunpack.c.l.b16 %v389
  %v422 = vunpack.c.l.b16 %v390
  %v423 = vunpack.c.l.b16 %v391
  %v424 = vunpack.c.l.b16 %v392
  %v425 = vunpack.c.l.b16 %v393
  %v426 = vunpack.c.l.b16 %v394
  %v427 = vunpack.c.l.b16 %v395
  %v428 = vunpack.c.l.b16 %v396
  %v429 = vunpack.c.l.b16 %v397
  %v430 = vunpack.c.l.b16 %v398
  %v431 = vpack.c.b16 %v416, %v415
  %v432 = vpack.c.b16 %v418, %v417
  %v433 = vpack.c.b16 %v420, %v419
  %v434 = vpack.c.b16 %v422, %v421
  %v435 = vpack.c.b16 %v424, %v423
  %v436 = vpack.c.b16 %v426, %v425
  %v437 = vpack.c.b16 %v428, %v427
  %v438 = vpack.c.b16 %v430, %v429
  %447 = vmatprep.subr.bf16.mxu0 0
  %448 = vmatpush1.bf16.msra.mxu0 %v431
  %449 = vmatprep.subr.bf16.mxu0 0
  %450 = vmatpush1.bf16.msra.mxu0 %v432
  %451 = vmatprep.subr.bf16.mxu0 0
  %452 = vmatpush1.bf16.msra.mxu0 %v433
  %453 = vmatprep.subr.bf16.mxu0 0
  %454 = vmatpush1.bf16.msra.mxu0 %v434
  %455 = vmatprep.subr.bf16.mxu0 0
  %456 = vmatpush1.bf16.msra.mxu0 %v435
  %457 = vmatprep.subr.bf16.mxu0 0
  %458 = vmatpush1.bf16.msra.mxu0 %v436
  %459 = vmatprep.subr.bf16.mxu0 0
  %460 = vmatpush1.bf16.msra.mxu0 %v437
  %461 = vmatprep.subr.bf16.mxu0 0
  %462 = vmatpush1.bf16.msra.mxu0 %v438
  %463 = vmatprep.subr.bf16.mxu0 0
  %464 = vmatpush1.bf16.msra.mxu0 0
  %465 = vmatprep.subr.bf16.mxu0 0
  %466 = vmatpush1.bf16.msra.mxu0 0
  %467 = vmatprep.subr.bf16.mxu0 0
  %468 = vmatpush1.bf16.msra.mxu0 0
  %469 = vmatprep.subr.bf16.mxu0 0
  %470 = vmatpush1.bf16.msra.mxu0 0
  %471 = vmatprep.subr.bf16.mxu0 0
  %472 = vmatpush1.bf16.msra.mxu0 0
  %473 = vmatprep.subr.bf16.mxu0 0
  %474 = vmatpush1.bf16.msra.mxu0 0
  %475 = vmatprep.subr.bf16.mxu0 0
  %476 = vmatpush1.bf16.msra.mxu0 0
  %477 = vmatprep.subr.bf16.mxu0 0
  %478 = vmatpush1.bf16.msra.mxu0 0
  %479 = vmatprep.mubr.bf16.mxu0 0
  %480 = vmatmul.mubr.bf16.gmra.mrb[0].mxu0 %v381
  %v481 = vpop.f32.mrb[0].mxu0
  %v482 = vadd.f32 0.0, %v481
  %v483 = vpop.f32.mrb[0].mxu0
  %v484 = vpop.f32.mrb[0].mxu0
  %v485 = vadd.f32 0.0, %v484
  %v486 = vpop.f32.mrb[0].mxu0
  %487 = vmatprep.mubr.bf16.mxu0 0
  %488 = vmatmul.mubr.bf16.gmra.mrb[0].mxu0 %v382
  %v489 = vpop.f32.mrb[0].mxu0
  %v490 = vadd.f32 0.0, %v489
  %v491 = vpop.f32.mrb[0].mxu0
  %v492 = vpop.f32.mrb[0].mxu0
  %v493 = vadd.f32 0.0, %v492
  %v494 = vpop.f32.mrb[0].mxu0
  %495 = vdwg.mxu0
  %496 = vst [vmem:[%s5] sm:$0xff] %v482
  %497 = vst [vmem:[%s5 + $0x8] sm:$0xff] %v485
  %498 = vst [vmem:[%s5 + $0x10] sm:$0xff] %v490
  %499 = vst [vmem:[%s5 + $0x18] sm:$0xff] %v493
  %v500 = vlaneseq
  %v501 = vand.u32 %v500, 127
  %vm502 = vcmp.lt.s32.totalorder %v501, 4
  %v503 = vsel %vm502, %v482, -1e+30
  %v504 = vsel %vm502, %v485, -1e+30
  %v505 = vsel %vm502, %v490, -1e+30
  %v506 = vsel %vm502, %v493, -1e+30
  %507 = vmax.xlane.f32.xlu0 %v503
  %v508 = vpop.xlane.xlu0 %507
  %509 = vmax.xlane.f32.xlu0 %v504
  %v510 = vpop.xlane.xlu0 %509
  %511 = vmax.xlane.f32.xlu0 %v505
  %v512 = vpop.xlane.xlu0 %511
  %513 = vmax.xlane.f32.xlu0 %v506
  %v514 = vpop.xlane.xlu0 %513
  %v515 = vsub.f32 %v503, %v508
  %v516 = vsub.f32 %v504, %v510
  %v517 = vsub.f32 %v505, %v512
  %v518 = vsub.f32 %v506, %v514
  %v519 = vmul.f32 %v515, 1.442695
  %v520 = vpow.pop %v519
  %v521 = vmul.f32 %v516, 1.442695
  %v522 = vpow.pop %v521
  %v523 = vmul.f32 %v517, 1.442695
  %v524 = vpow.pop %v523
  %v525 = vmul.f32 %v518, 1.442695
  %v526 = vpow.pop %v525
  %527 = vadd.xlane.f32.xlu0 %v520
  %v528 = vpop.xlane.xlu0 %527
  %529 = vadd.xlane.f32.xlu0 %v522
  %v530 = vpop.xlane.xlu0 %529
  %531 = vadd.xlane.f32.xlu0 %v524
  %v532 = vpop.xlane.xlu0 %531
  %533 = vadd.xlane.f32.xlu0 %v526
  %v534 = vpop.xlane.xlu0 %533
  %v535 = vlog2.pop %v528
  %v536 = vmul.f32 %v535, 0.6931472
  %v537 = vlog2.pop %v530
  %v538 = vmul.f32 %v537, 0.6931472
  %v539 = vlog2.pop %v532
  %v540 = vmul.f32 %v539, 0.6931472
  %v541 = vlog2.pop %v534
  %v542 = vmul.f32 %v541, 0.6931472
  %v543 = vadd.f32 %v536, %v508
  %v544 = vadd.f32 %v538, %v510
  %v545 = vadd.f32 %v540, %v512
  %v546 = vadd.f32 %v542, %v514
  %v547 = vld [vmem:[%s1] sm:$0xff]
  %v548 = vld [vmem:[%s1 + $0x8] sm:$0xff]
  %v549 = vld [vmem:[%s1 + $0x10] sm:$0xff]
  %v550 = vld [vmem:[%s1 + $0x18] sm:$0xff]
  %551 = vset.pattern.permute.xlu0 0
  %552 = vperm.xlu0 %551, %v547
  %v553 = vpop.permute.xlu0 %552
  %554 = vset.pattern.permute.xlu0 0
  %555 = vperm.xlu0 %554, %v548
  %v556 = vpop.permute.xlu0 %555
  %557 = vset.pattern.permute.xlu0 0
  %558 = vperm.xlu0 %557, %v549
  %v559 = vpop.permute.xlu0 %558
  %560 = vset.pattern.permute.xlu0 0
  %561 = vperm.xlu0 %560, %v550
  %v562 = vpop.permute.xlu0 %561
  %vm563 = vcmp.eq.s32.totalorder %v501, %v553
  %vm564 = vcmp.eq.s32.totalorder %v501, %v556
  %vm565 = vcmp.eq.s32.totalorder %v501, %v559
  %vm566 = vcmp.eq.s32.totalorder %v501, %v562
  %v567 = vsel %vm563, %v482, 0.0
  %v568 = vsel %vm564, %v485, 0.0
  %v569 = vsel %vm565, %v490, 0.0
  %v570 = vsel %vm566, %v493, 0.0
  %571 = vadd.xlane.f32.xlu0 %v567
  %v572 = vpop.xlane.xlu0 %571
  %573 = vadd.xlane.f32.xlu0 %v568
  %v574 = vpop.xlane.xlu0 %573
  %575 = vadd.xlane.f32.xlu0 %v569
  %v576 = vpop.xlane.xlu0 %575
  %577 = vadd.xlane.f32.xlu0 %v570
  %v578 = vpop.xlane.xlu0 %577
  %v579 = vsub.f32 %v543, %v572
  %v580 = vsub.f32 %v544, %v574
  %v581 = vsub.f32 %v545, %v576
  %v582 = vsub.f32 %v546, %v578
  %583 = vst [vmem:[%s6] sm:$0xff] %v579
  %584 = vst [vmem:[%s6 + $0x8] sm:$0xff] %v580
  %585 = vst [vmem:[%s6 + $0x10] sm:$0xff] %v581
  %586 = vst [vmem:[%s6 + $0x18] sm:$0xff] %v582
  // Predicated region
  $region22: #{_pgen_dense_path.1} parent=0 // pred_check
    _
  $region23: #{_pgen_dense_path.1} parent=0 // pred_check_branch
    %588 = sbr.rel (0) target = $region25
  $region24: #{_pgen_dense_path.1} parent=0 // pred_region
    _
  $region25: #{_pgen_dense_path.1} parent=0 // pred_fallthru
    _
  // Predicated region
  $region26: #{_pgen_dense_path.1} parent=0 // pred_check
    _
  $region27: #{_pgen_dense_path.1} parent=0 // pred_check_branch
    %590 = sbr.rel (0) target = $region29
  $region28: #{_pgen_dense_path.1} parent=0 // pred_region
    _
  $region29: #{_pgen_dense_path.1} parent=0 // pred_fallthru
    _
  // Predicated region
  $region30: #{_pgen_dense_path.1} parent=0 // pred_check
    _
  $region31: #{_pgen_dense_path.1} parent=0 // pred_check_branch
    %592 = sbr.rel (0) target = $region33
  $region32: #{_pgen_dense_path.1} parent=0 // pred_region
    _
  $region33: #{_pgen_dense_path.1} parent=0 // pred_fallthru
    _
  // Predicated region
  $region34: #{_pgen_dense_path.1} parent=0 // pred_check
    _
  $region35: #{_pgen_dense_path.1} parent=0 // pred_check_branch
    %594 = sbr.rel (0) target = $region37
  $region36: #{_pgen_dense_path.1} parent=0 // pred_region
    _
  $region37: #{_pgen_dense_path.1} parent=0 // pred_fallthru
    _

</llo_original>
